<compile_context>
chip_gen: v7x
topology: tpu7x:2x2x1
jax: 0.10.0
libtpu: 0.0.40
codegen_flags: <defaults>
</compile_context>

<pallas_src>
import functools

import jax
import jax.numpy as jnp
from jax.experimental import pallas as pl
from jax.experimental.pallas import tpu as pltpu

LANE = 128  # TPU lane width; q/k/v each padded to one full lane tile


def head_kernel(x_ref, w_ref, out_ref, *, B, T, scale):
    x = x_ref[...]                                          # (B*T, C) f32
    # One wide matmul: (B*T, C) @ (C, 3*LANE) -> [ q | k | v ], each 128-lane padded.
    qkv = jnp.dot(x, w_ref[...], preferred_element_type=jnp.float32)

    # Causal mask, built once per kernel invocation (outside the batch loop).
    row = jax.lax.broadcasted_iota(jnp.int32, (T, T), 0)
    col = jax.lax.broadcasted_iota(jnp.int32, (T, T), 1)
    causal = row >= col
    neg = jnp.float32(-1e30)

    # Tiny static loop over batch only for the (T, T) score / softmax step.
    for b in range(B):
        r0 = b * T
        q = qkv[r0:r0 + T, 0 * LANE:1 * LANE]               # (T, 128), lane-aligned
        k = qkv[r0:r0 + T, 1 * LANE:2 * LANE]
        v = qkv[r0:r0 + T, 2 * LANE:3 * LANE]

        # Padded lanes are exactly zero, so q @ k.T equals the unpadded product.
        wei = jnp.dot(q, k.T, preferred_element_type=jnp.float32) * scale
        wei = jnp.where(causal, wei, neg)
        wei = wei - jnp.max(wei, axis=-1, keepdims=True)
        p = jnp.exp(wei)
        inv = pl.reciprocal(jnp.sum(p, axis=-1, keepdims=True), approx=True)
        p = p * inv

        # (T, T) @ (T, 128) -> lane-dense (T, 128) store (padded cols are zero).
        out_ref[r0:r0 + T, :] = jnp.dot(p, v, preferred_element_type=jnp.float32)


def head_forward(x, wq, wk, wv, head_size):
    """Head.forward.  x: (B, T, C) f32; w{q,k,v}: (head_size, C) nn.Linear weights."""
    B, T, C = x.shape
    assert head_size <= LANE
    assert (B * T) % 8 == 0, "B*T must be a multiple of 8 sublanes for this layout"

    def pad_w(w):  # (HS, C) -> (C, LANE), zero-padded beyond head_size
        return jnp.pad(w.T.astype(jnp.float32), ((0, 0), (0, LANE - head_size)))

    # Fused, lane-padded QKV weight: (C, 3*LANE). Built with plain-JAX glue.
    w_fused = jnp.concatenate([pad_w(wq), pad_w(wk), pad_w(wv)], axis=1)
    x2d = x.reshape(B * T, C).astype(jnp.float32)

    kernel = functools.partial(
        head_kernel, B=B, T=T, scale=float(head_size) ** -0.5)

    out2d = pl.pallas_call(
        kernel,
        out_shape=jax.ShapeDtypeStruct((B * T, LANE), jnp.float32),
        grid=(1,),                                   # single fused grid step
        in_specs=[pl.BlockSpec((B * T, C), lambda i: (0, 0)),
                  pl.BlockSpec((C, 3 * LANE), lambda i: (0, 0))],
        out_specs=pl.BlockSpec((B * T, LANE), lambda i: (0, 0)),
        compiler_params=pltpu.CompilerParams(
            dimension_semantics=("arbitrary",)),
    )(x2d, w_fused)

    return out2d.reshape(B, T, LANE)[:, :, :head_size]


def head_ref(x, wq, wk, wv, head_size):
    """Pure-JAX reference matching the PyTorch Head.forward (eval mode)."""
    q = x @ wq.T
    k = x @ wk.T
    v = x @ wv.T
    T = x.shape[1]
    wei = (q @ jnp.swapaxes(k, -1, -2)) * (head_size ** -0.5)
    causal = jnp.tril(jnp.ones((T, T), bool))
    wei = jnp.where(causal, wei, -jnp.inf)
    wei = jax.nn.softmax(wei, axis=-1)
    return wei @ v


if __name__ == "__main__":
    # module-level hyperparams from the reference script
    n_embd = 32
    block_size = 8
    head_size = 16
    B, T = 2, block_size

    key = jax.random.PRNGKey(0)
    kx, kq, kk, kv = jax.random.split(key, 4)
    x = jax.random.normal(kx, (B, T, n_embd), jnp.float32)
    wq = jax.random.normal(kq, (head_size, n_embd), jnp.float32) * 0.02
    wk = jax.random.normal(kk, (head_size, n_embd), jnp.float32) * 0.02
    wv = jax.random.normal(kv, (head_size, n_embd), jnp.float32) * 0.02

    out = head_forward(x, wq, wk, wv, head_size)
    out = jax.block_until_ready(out)

    ref = head_ref(x, wq, wk, wv, head_size)
    assert out.shape == (B, T, head_size)
    max_diff = jnp.max(jnp.abs(out - ref))
    assert jnp.allclose(out, ref, atol=1e-3, rtol=1e-3), f"max abs diff {max_diff}"

    print("KERNEL_OK")
</pallas_src>

<mosaic_0001>
module attributes {stable_mosaic.version = 11 : i64} {
  func.func @head_kernel(%arg0: i32, %arg1: memref<16x32xf32, #tpu.memory_space<vmem>>, %arg2: memref<32x384xf32, #tpu.memory_space<vmem>>, %arg3: memref<16x128xf32, #tpu.memory_space<vmem>>) attributes {dimension_semantics = [#tpu.dimension_semantics<arbitrary>], iteration_bounds = array<i64: 1>, scalar_prefetch = 0 : i64, scratch_operands = 0 : i64, tpu.core_type = #tpu.core_type<tc>, window_params = [{pipeline_mode = #tpu.pipeline_mode<synchronous>, transform_indices = @transform_0, window_bounds = array<i64: 16, 32>}, {pipeline_mode = #tpu.pipeline_mode<synchronous>, transform_indices = @transform_1, window_bounds = array<i64: 32, 384>}, {pipeline_mode = #tpu.pipeline_mode<synchronous>, transform_indices = @transform_2, window_bounds = array<i64: 16, 128>}]} {
    %c0 = arith.constant 0 : index
    %c0_0 = arith.constant 0 : index
    %0 = vector.load %arg1[%c0, %c0_0] : memref<16x32xf32, #tpu.memory_space<vmem>>, vector<16x32xf32>
    %c0_1 = arith.constant 0 : index
    %c0_2 = arith.constant 0 : index
    %1 = vector.load %arg2[%c0_1, %c0_2] : memref<32x384xf32, #tpu.memory_space<vmem>>, vector<32x384xf32>
    %cst = arith.constant dense<0.000000e+00> : vector<16x384xf32>
    %2 = tpu.matmul %0, %1, %cst {dimension_numbers = #tpu.dot_dimension_numbers<[1], [0], [0], [1], [0, 0, 1, 1], [], []>} : vector<16x32xf32>, vector<32x384xf32>, vector<16x384xf32> -> vector<16x384xf32>
    %3 = tpu.iota {dimensions = array<i32: 0>} : vector<8x8xi32>
    %4 = tpu.iota {dimensions = array<i32: 1>} : vector<8x8xi32>
    %5 = arith.cmpi sge, %3, %4 : vector<8x8xi32>
    %6 = vector.extract_strided_slice %2 {offsets = [0, 0], sizes = [8, 128], strides = [1, 1]} : vector<16x384xf32> to vector<8x128xf32>
    %7 = vector.extract_strided_slice %2 {offsets = [0, 128], sizes = [8, 128], strides = [1, 1]} : vector<16x384xf32> to vector<8x128xf32>
    %8 = vector.extract_strided_slice %2 {offsets = [0, 256], sizes = [8, 128], strides = [1, 1]} : vector<16x384xf32> to vector<8x128xf32>
    %9 = tpu.transpose %7, [1, 0] : vector<8x128xf32> -> vector<128x8xf32>
    %cst_3 = arith.constant dense<0.000000e+00> : vector<8x8xf32>
    %10 = tpu.matmul %6, %9, %cst_3 {dimension_numbers = #tpu.dot_dimension_numbers<[1], [0], [0], [1], [0, 0, 1, 1], [], []>} : vector<8x128xf32>, vector<128x8xf32>, vector<8x8xf32> -> vector<8x8xf32>
    %cst_4 = arith.constant 2.500000e-01 : f32
    %11 = vector.broadcast %cst_4 : f32 to vector<8x8xf32>
    %12 = arith.mulf %10, %11 : vector<8x8xf32>
    %cst_5 = arith.constant -1.000000e+30 : f32
    %13 = vector.broadcast %cst_5 : f32 to vector<8x8xf32>
    %14 = arith.select %5, %12, %13 : vector<8x8xi1>, vector<8x8xf32>
    %cst_6 = arith.constant dense<0xFF800000> : vector<8xf32>
    %15 = vector.multi_reduction <maximumf>, %14, %cst_6 [1] : vector<8x8xf32> to vector<8xf32>
    %16 = vector.shape_cast %15 : vector<8xf32> to vector<8x1xf32>
    %17 = vector.broadcast %16 : vector<8x1xf32> to vector<8x8xf32>
    %18 = arith.subf %14, %17 : vector<8x8xf32>
    %19 = math.exp %18 : vector<8x8xf32>
    %cst_7 = arith.constant dense<0.000000e+00> : vector<8xf32>
    %20 = vector.multi_reduction <add>, %19, %cst_7 [1] : vector<8x8xf32> to vector<8xf32>
    %21 = vector.shape_cast %20 : vector<8xf32> to vector<8x1xf32>
    %22 = tpu.reciprocal %21 {approx = true} : vector<8x1xf32> -> vector<8x1xf32>
    %23 = vector.broadcast %22 : vector<8x1xf32> to vector<8x8xf32>
    %24 = arith.mulf %19, %23 : vector<8x8xf32>
    %cst_8 = arith.constant dense<0.000000e+00> : vector<8x128xf32>
    %25 = tpu.matmul %24, %8, %cst_8 {dimension_numbers = #tpu.dot_dimension_numbers<[1], [0], [0], [1], [0, 0, 1, 1], [], []>} : vector<8x8xf32>, vector<8x128xf32>, vector<8x128xf32> -> vector<8x128xf32>
    %c0_9 = arith.constant 0 : index
    %c0_10 = arith.constant 0 : index
    %26 = vector.load %arg3[%c0_9, %c0_10] : memref<16x128xf32, #tpu.memory_space<vmem>>, vector<8x128xf32>
    tpu.vector_store %arg3[%c0_9, %c0_10], %25 {strides = array<i32>} : memref<16x128xf32, #tpu.memory_space<vmem>>, vector<8x128xf32>,
    %27 = vector.extract_strided_slice %2 {offsets = [8, 0], sizes = [8, 128], strides = [1, 1]} : vector<16x384xf32> to vector<8x128xf32>
    %28 = vector.extract_strided_slice %2 {offsets = [8, 128], sizes = [8, 128], strides = [1, 1]} : vector<16x384xf32> to vector<8x128xf32>
    %29 = vector.extract_strided_slice %2 {offsets = [8, 256], sizes = [8, 128], strides = [1, 1]} : vector<16x384xf32> to vector<8x128xf32>
    %30 = tpu.transpose %28, [1, 0] : vector<8x128xf32> -> vector<128x8xf32>
    %cst_11 = arith.constant dense<0.000000e+00> : vector<8x8xf32>
    %31 = tpu.matmul %27, %30, %cst_11 {dimension_numbers = #tpu.dot_dimension_numbers<[1], [0], [0], [1], [0, 0, 1, 1], [], []>} : vector<8x128xf32>, vector<128x8xf32>, vector<8x8xf32> -> vector<8x8xf32>
    %cst_12 = arith.constant 2.500000e-01 : f32
    %32 = vector.broadcast %cst_12 : f32 to vector<8x8xf32>
    %33 = arith.mulf %31, %32 : vector<8x8xf32>
    %cst_13 = arith.constant -1.000000e+30 : f32
    %34 = vector.broadcast %cst_13 : f32 to vector<8x8xf32>
    %35 = arith.select %5, %33, %34 : vector<8x8xi1>, vector<8x8xf32>
    %cst_14 = arith.constant dense<0xFF800000> : vector<8xf32>
    %36 = vector.multi_reduction <maximumf>, %35, %cst_14 [1] : vector<8x8xf32> to vector<8xf32>
    %37 = vector.shape_cast %36 : vector<8xf32> to vector<8x1xf32>
    %38 = vector.broadcast %37 : vector<8x1xf32> to vector<8x8xf32>
    %39 = arith.subf %35, %38 : vector<8x8xf32>
    %40 = math.exp %39 : vector<8x8xf32>
    %cst_15 = arith.constant dense<0.000000e+00> : vector<8xf32>
    %41 = vector.multi_reduction <add>, %40, %cst_15 [1] : vector<8x8xf32> to vector<8xf32>
    %42 = vector.shape_cast %41 : vector<8xf32> to vector<8x1xf32>
    %43 = tpu.reciprocal %42 {approx = true} : vector<8x1xf32> -> vector<8x1xf32>
    %44 = vector.broadcast %43 : vector<8x1xf32> to vector<8x8xf32>
    %45 = arith.mulf %40, %44 : vector<8x8xf32>
    %cst_16 = arith.constant dense<0.000000e+00> : vector<8x128xf32>
    %46 = tpu.matmul %45, %29, %cst_16 {dimension_numbers = #tpu.dot_dimension_numbers<[1], [0], [0], [1], [0, 0, 1, 1], [], []>} : vector<8x8xf32>, vector<8x128xf32>, vector<8x128xf32> -> vector<8x128xf32>
    %c8 = arith.constant 8 : index
    %c0_17 = arith.constant 0 : index
    %47 = vector.load %arg3[%c8, %c0_17] : memref<16x128xf32, #tpu.memory_space<vmem>>, vector<8x128xf32>
    tpu.vector_store %arg3[%c8, %c0_17], %46 {strides = array<i32>} : memref<16x128xf32, #tpu.memory_space<vmem>>, vector<8x128xf32>,
    return
  }
  func.func @transform_0(%arg0: i32) -> (i32, i32) {
    %c0_i32 = arith.constant 0 : i32
    %c0_i32_0 = arith.constant 0 : i32
    %c0_i32_1 = arith.constant 0 : i32
    return %c0_i32, %c0_i32_0 : i32, i32
  }
  func.func @transform_1(%arg0: i32) -> (i32, i32) {
    %c0_i32 = arith.constant 0 : i32
    %c0_i32_0 = arith.constant 0 : i32
    %c0_i32_1 = arith.constant 0 : i32
    return %c0_i32, %c0_i32_0 : i32, i32
  }
  func.func @transform_2(%arg0: i32) -> (i32, i32) {
    %c0_i32 = arith.constant 0 : i32
    %c0_i32_0 = arith.constant 0 : i32
    %c0_i32_1 = arith.constant 0 : i32
    return %c0_i32, %c0_i32_0 : i32, i32
  }
}

</mosaic_0001>

<llo_original>
// kernel: tpu_custom_call.1
$region0: #{tpu_custom_call.1}
  #allocation0 [shape = 'u32[]', space=smem, size = 0x4, offset = 0x4, fixed_abs, tag = 'smem constant byte address 0x4 - core index']
  #allocation1 [shape = 'u32[144,128]{1,0:T(1,128)}', space=vmem, size = 0x12000, scoped, tag = 'internal scratch']
  %s0 = inlined_call_operand.hbm [shape: f32[16,32], index: 0, kind: input, shape index: {}]
  %s1 = inlined_call_operand.hbm [shape: f32[32,384], index: 1, kind: input, shape index: {}]
  %s2 = inlined_call_operand.hbm [shape: f32[16,128], index: 2, kind: output, shape index: {}]
  %s3 = sld [smem:[#allocation0]]
  $region26: #{tpu_custom_call.1} parent=0
    _
  %s5 = ssub.s32 1, %s3
  %s6 = scalar_select 0, %s5, %s3
  $region1: #{tpu_custom_call.1} parent=0
    #allocation2 [shape = 'u8[8192]{0}', space=vmem, size = 0x2000, scoped, tag = 'input window, operand 0, single buffered']
    #allocation3 [shape = 's32[1]{0}', space=sflag, size = 0x4, scoped, tag = 'scoped memory for tpu_custom_call.1']
    #allocation4 [shape = 's32[1]{0}', space=sflag, size = 0x4, scoped, tag = 'scoped memory for tpu_custom_call.1']
    #allocation5 [shape = 'u8[49152]{0}', space=vmem, size = 0xc000, scoped, tag = 'input window, operand 1, single buffered']
    #allocation6 [shape = 's32[1]{0}', space=sflag, size = 0x4, scoped, tag = 'scoped memory for tpu_custom_call.1']
    #allocation7 [shape = 'u8[8192]{0}', space=vmem, size = 0x2000, scoped, tag = 'output window, operand 0, single buffered']
    %7 = vsyncpa [#allocation3], 0
    %8 = vsyncpa [#allocation6], 0
    %9 = vsyncpa [#allocation4], 0
    // Predicated region
    $region2: #{tpu_custom_call.1} parent=1 // pred_check
      _
    $region3: #{tpu_custom_call.1} parent=1 // pred_check_branch
      %11 = sbr.rel (0) target = $region5
    $region4: #{tpu_custom_call.1} parent=1 // pred_region
      %s13 = ssub.s32 256, 256
      %14 = vsyncadd [#allocation3], %s13
      %s15 = sshll.u32 [#allocation2], 4
      %s16 = int_to_ptr.vmem [resolvable:$true] %s15
      %21 = dma.hbm_to_vmem [thread:$0]  %s0, 256, %s16, [#allocation3], 128, 128, 8
    $region5: #{tpu_custom_call.1} parent=1 // pred_fallthru
      _
    // Predicated region
    $region6: #{tpu_custom_call.1} parent=1 // pred_check
      _
    $region7: #{tpu_custom_call.1} parent=1 // pred_check_branch
      %23 = sbr.rel (0) target = $region9
    $region8: #{tpu_custom_call.1} parent=1 // pred_region
      %s25 = ssub.s32 1536, 1536
      %26 = vsyncadd [#allocation6], %s25
      %s27 = sshll.u32 [#allocation5], 4
      %s28 = int_to_ptr.vmem [resolvable:$true] %s27
      %33 = dma.hbm_to_vmem [thread:$0]  %s1, 1536, %s28, [#allocation6], 384, 384, 24
    $region9: #{tpu_custom_call.1} parent=1 // pred_fallthru
      _
    // Predicated region
    $region10: #{tpu_custom_call.1} parent=1 // pred_check
      _
    $region11: #{tpu_custom_call.1} parent=1 // pred_check_branch
      %35 = sbr.rel (0) target = $region13
    $region12: #{tpu_custom_call.1} parent=1 // pred_region
      %36 = dma.done [#allocation3], 256
    $region13: #{tpu_custom_call.1} parent=1 // pred_fallthru
      _
    // Predicated region
    $region14: #{tpu_custom_call.1} parent=1 // pred_check
      _
    $region15: #{tpu_custom_call.1} parent=1 // pred_check_branch
      %38 = sbr.rel (0) target = $region17
    $region16: #{tpu_custom_call.1} parent=1 // pred_region
      %39 = dma.done [#allocation6], 1536
    $region17: #{tpu_custom_call.1} parent=1 // pred_fallthru
      _
    %v40 = vld [vmem:[#allocation2] sm:$0xff]
    %v41 = vld [vmem:[#allocation2 + $0x8] sm:$0xff]
    %v42 = vld [vmem:[#allocation5] sm:$0xff]
    %v43 = vld [vmem:[#allocation5 + $0x8] sm:$0xff]
    %v44 = vld [vmem:[#allocation5 + $0x10] sm:$0xff]
    %v45 = vld [vmem:[#allocation5 + $0x18] sm:$0xff]
    %v46 = vld [vmem:[#allocation5 + $0x20] sm:$0xff]
    %v47 = vld [vmem:[#allocation5 + $0x28] sm:$0xff]
    %v48 = vld [vmem:[#allocation5 + $0x30] sm:$0xff]
    %v49 = vld [vmem:[#allocation5 + $0x38] sm:$0xff]
    %v50 = vld [vmem:[#allocation5 + $0x40] sm:$0xff]
    %v51 = vld [vmem:[#allocation5 + $0x48] sm:$0xff]
    %v52 = vld [vmem:[#allocation5 + $0x50] sm:$0xff]
    %v53 = vld [vmem:[#allocation5 + $0x58] sm:$0xff]
    %vm54 = vcmask 261120
    %v56 = vsel %vm54, %v40, 0
    %v59 = vsel %vm54, %v41, 0
    %61 = vmatprep.subr.mxu0 %v43
    %62 = vmatpush1.msra.mxu0 %v42
    %63 = vmatprep.subr.mxu0 %v46
    %64 = vmatpush1.msra.mxu0 %v45
    %65 = vmatprep.subr.mxu0 %v49
    %66 = vmatpush1.msra.mxu0 %v48
    %67 = vmatprep.subr.mxu0 %v52
    %68 = vmatpush1.msra.mxu0 %v51
    %69 = vmatprep.subr.mxu0 0.0
    %70 = vmatpush1.msra.mxu0 0.0
    %71 = vmatprep.subr.mxu0 0.0
    %72 = vmatpush1.msra.mxu0 0.0
    %73 = vmatprep.subr.mxu0 0.0
    %74 = vmatpush1.msra.mxu0 0.0
    %75 = vmatprep.subr.mxu0 0.0
    %76 = vmatpush1.msra.mxu0 0.0
    %77 = vmatprep.subr.mxu0 0.0
    %78 = vmatpush1.msra.mxu0 0.0
    %79 = vmatprep.subr.mxu0 0.0
    %80 = vmatpush1.msra.mxu0 0.0
    %81 = vmatprep.subr.mxu0 0.0
    %82 = vmatpush1.msra.mxu0 0.0
    %83 = vmatprep.subr.mxu0 0.0
    %84 = vmatpush1.msra.mxu0 0.0
    %85 = vmatprep.subr.mxu0 0.0
    %86 = vmatpush1.msra.mxu0 0.0
    %87 = vmatprep.subr.mxu0 0.0
    %88 = vmatpush1.msra.mxu0 0.0
    %89 = vmatprep.subr.mxu0 0.0
    %90 = vmatpush1.msra.mxu0 0.0
    %91 = vmatprep.subr.mxu0 0.0
    %92 = vmatpush1.msra.mxu0 0.0
    %93 = vmatprep.subr.mxu0 0.0
    %94 = vmatpush1.msra.mxu0 0.0
    %95 = vmatprep.subr.mxu0 0.0
    %96 = vmatpush1.msra.mxu0 0.0
    %97 = vmatprep.subr.mxu0 0.0
    %98 = vmatpush1.msra.mxu0 0.0
    %99 = vmatprep.subr.mxu0 0.0
    %100 = vmatpush1.msra.mxu0 0.0
    %101 = vmatprep.subr.mxu0 0.0
    %102 = vmatpush1.msra.mxu0 0.0
    %103 = vmatprep.subr.mxu0 0.0
    %104 = vmatpush1.msra.mxu0 0.0
    %105 = vmatprep.subr.mxu0 0.0
    %106 = vmatpush1.msra.mxu0 0.0
    %107 = vmatprep.subr.mxu0 0.0
    %108 = vmatpush1.msra.mxu0 0.0
    %109 = vmatprep.subr.mxu0 0.0
    %110 = vmatpush1.msra.mxu0 0.0
    %111 = vmatprep.subr.mxu0 0.0
    %112 = vmatpush1.msra.mxu0 0.0
    %113 = vmatprep.subr.mxu0 0.0
    %114 = vmatpush1.msra.mxu0 0.0
    %115 = vmatprep.subr.mxu0 0.0
    %116 = vmatpush1.msra.mxu0 0.0
    %117 = vmatprep.subr.mxu0 0.0
    %118 = vmatpush1.msra.mxu0 0.0
    %119 = vmatprep.subr.mxu0 0.0
    %120 = vmatpush1.msra.mxu0 0.0
    %121 = vmatprep.subr.mxu0 0.0
    %122 = vmatpush1.msra.mxu0 0.0
    %123 = vmatprep.subr.mxu0 0.0
    %124 = vmatpush1.msra.mxu0 0.0
    %125 = vmatprep.mubr.f32.mxu0 0.0
    %126 = vmatmul.mubr.f32.gmra.mrb[0].mxu0 %v56
    %v127 = vpop.f32.mrb[0].mxu0
    %v128 = vadd.f32 0.0, %v127
    %v129 = vpop.f32.mrb[0].mxu0
    %v130 = vadd.f32 0.0, %v129
    %131 = vmatprep.mubr.f32.mxu0 0.0
    %132 = vmatmul.mubr.f32.gmra.mrb[0].mxu0 %v59
    %v133 = vpop.f32.mrb[0].mxu0
    %v134 = vadd.f32 0.0, %v133
    %v135 = vpop.f32.mrb[0].mxu0
    %v136 = vadd.f32 0.0, %v135
    %137 = vdwg.mxu0
    %138 = vmatprep.subr.mxu0 0.0
    %139 = vmatpush1.msra.mxu0 %v44
    %140 = vmatprep.subr.mxu0 0.0
    %141 = vmatpush1.msra.mxu0 %v47
    %142 = vmatprep.subr.mxu0 0.0
    %143 = vmatpush1.msra.mxu0 %v50
    %144 = vmatprep.subr.mxu0 0.0
    %145 = vmatpush1.msra.mxu0 %v53
    %146 = vmatprep.subr.mxu0 0.0
    %147 = vmatpush1.msra.mxu0 0.0
    %148 = vmatprep.subr.mxu0 0.0
    %149 = vmatpush1.msra.mxu0 0.0
    %150 = vmatprep.subr.mxu0 0.0
    %151 = vmatpush1.msra.mxu0 0.0
    %152 = vmatprep.subr.mxu0 0.0
    %153 = vmatpush1.msra.mxu0 0.0
    %154 = vmatprep.subr.mxu0 0.0
    %155 = vmatpush1.msra.mxu0 0.0
    %156 = vmatprep.subr.mxu0 0.0
    %157 = vmatpush1.msra.mxu0 0.0
    %158 = vmatprep.subr.mxu0 0.0
    %159 = vmatpush1.msra.mxu0 0.0
    %160 = vmatprep.subr.mxu0 0.0
    %161 = vmatpush1.msra.mxu0 0.0
    %162 = vmatprep.subr.mxu0 0.0
    %163 = vmatpush1.msra.mxu0 0.0
    %164 = vmatprep.subr.mxu0 0.0
    %165 = vmatpush1.msra.mxu0 0.0
    %166 = vmatprep.subr.mxu0 0.0
    %167 = vmatpush1.msra.mxu0 0.0
    %168 = vmatprep.subr.mxu0 0.0
    %169 = vmatpush1.msra.mxu0 0.0
    %170 = vmatprep.subr.mxu0 0.0
    %171 = vmatpush1.msra.mxu0 0.0
    %172 = vmatprep.subr.mxu0 0.0
    %173 = vmatpush1.msra.mxu0 0.0
    %174 = vmatprep.subr.mxu0 0.0
    %175 = vmatpush1.msra.mxu0 0.0
    %176 = vmatprep.subr.mxu0 0.0
    %177 = vmatpush1.msra.mxu0 0.0
    %178 = vmatprep.subr.mxu0 0.0
    %179 = vmatpush1.msra.mxu0 0.0
    %180 = vmatprep.subr.mxu0 0.0
    %181 = vmatpush1.msra.mxu0 0.0
    %182 = vmatprep.subr.mxu0 0.0
    %183 = vmatpush1.msra.mxu0 0.0
    %184 = vmatprep.subr.mxu0 0.0
    %185 = vmatpush1.msra.mxu0 0.0
    %186 = vmatprep.subr.mxu0 0.0
    %187 = vmatpush1.msra.mxu0 0.0
    %188 = vmatprep.subr.mxu0 0.0
    %189 = vmatpush1.msra.mxu0 0.0
    %190 = vmatprep.subr.mxu0 0.0
    %191 = vmatpush1.msra.mxu0 0.0
    %192 = vmatprep.subr.mxu0 0.0
    %193 = vmatpush1.msra.mxu0 0.0
    %194 = vmatprep.subr.mxu0 0.0
    %195 = vmatpush1.msra.mxu0 0.0
    %196 = vmatprep.subr.mxu0 0.0
    %197 = vmatpush1.msra.mxu0 0.0
    %198 = vmatprep.subr.mxu0 0.0
    %199 = vmatpush1.msra.mxu0 0.0
    %200 = vmatprep.subr.mxu0 0.0
    %201 = vmatpush1.msra.mxu0 0.0
    %202 = vmatprep.mubr.f32.mxu0 0.0
    %203 = vmatmul.mubr.f32.gmra.mrb[0].mxu0 %v56
    %v204 = vpop.f32.mrb[0].mxu0
    %v205 = vadd.f32 0.0, %v204
    %v206 = vpop.f32.mrb[0].mxu0
    %207 = vmatprep.mubr.f32.mxu0 0.0
    %208 = vmatmul.mubr.f32.gmra.mrb[0].mxu0 %v59
    %v209 = vpop.f32.mrb[0].mxu0
    %v210 = vadd.f32 0.0, %v209
    %v211 = vpop.f32.mrb[0].mxu0
    %212 = vdwg.mxu0
    %v213 = vlaneseq
    %v214 = vshrl.u32 %v213, 7
    %v215 = vlaneseq
    %v216 = vand.u32 %v215, 127
    %vm217 = vcmp.ge.s32.totalorder %v214, %v216
    %218 = vmatprep.subr.mxu0 0.0
    %219 = vmatpush1.xpose.msra.mxu0 %v130
    %220 = vmatprep.subr.mxu0 0.0
    %221 = vmatpush1.xpose.msra.mxu0 0.0
    %222 = vmatprep.subr.mxu0 0.0
    %223 = vmatpush1.xpose.msra.mxu0 0.0
    %224 = vmatprep.subr.mxu0 0.0
    %225 = vmatpush1.xpose.msra.mxu0 0.0
    %226 = vmatprep.subr.mxu0 0.0
    %227 = vmatpush1.xpose.msra.mxu0 0.0
    %228 = vmatprep.subr.mxu0 0.0
    %229 = vmatpush1.xpose.msra.mxu0 0.0
    %230 = vmatprep.subr.mxu0 0.0
    %231 = vmatpush1.xpose.msra.mxu0 0.0
    %232 = vmatprep.subr.mxu0 0.0
    %233 = vmatpush1.xpose.msra.mxu0 0.0
    %234 = vmatprep.subr.mxu0 0.0
    %235 = vmatpush1.xpose.msra.mxu0 0.0
    %236 = vmatprep.subr.mxu0 0.0
    %237 = vmatpush1.xpose.msra.mxu0 0.0
    %238 = vmatprep.subr.mxu0 0.0
    %239 = vmatpush1.xpose.msra.mxu0 0.0
    %240 = vmatprep.subr.mxu0 0.0
    %241 = vmatpush1.xpose.msra.mxu0 0.0
    %242 = vmatprep.subr.mxu0 0.0
    %243 = vmatpush1.xpose.msra.mxu0 0.0
    %244 = vmatprep.subr.mxu0 0.0
    %245 = vmatpush1.xpose.msra.mxu0 0.0
    %246 = vmatprep.subr.mxu0 0.0
    %247 = vmatpush1.xpose.msra.mxu0 0.0
    %248 = vmatprep.subr.mxu0 0.0
    %249 = vmatpush1.xpose.msra.mxu0 0.0
    %250 = vmatprep.subr.mxu0 0.0
    %251 = vmatpush1.xpose.msra.mxu0 0.0
    %252 = vmatprep.subr.mxu0 0.0
    %253 = vmatpush1.xpose.msra.mxu0 0.0
    %254 = vmatprep.subr.mxu0 0.0
    %255 = vmatpush1.xpose.msra.mxu0 0.0
    %256 = vmatprep.subr.mxu0 0.0
    %257 = vmatpush1.xpose.msra.mxu0 0.0
    %258 = vmatprep.subr.mxu0 0.0
    %259 = vmatpush1.xpose.msra.mxu0 0.0
    %260 = vmatprep.subr.mxu0 0.0
    %261 = vmatpush1.xpose.msra.mxu0 0.0
    %262 = vmatprep.subr.mxu0 0.0
    %263 = vmatpush1.xpose.msra.mxu0 0.0
    %264 = vmatprep.subr.mxu0 0.0
    %265 = vmatpush1.xpose.msra.mxu0 0.0
    %266 = vmatprep.subr.mxu0 0.0
    %267 = vmatpush1.xpose.msra.mxu0 0.0
    %268 = vmatprep.subr.mxu0 0.0
    %269 = vmatpush1.xpose.msra.mxu0 0.0
    %270 = vmatprep.subr.mxu0 0.0
    %271 = vmatpush1.xpose.msra.mxu0 0.0
    %272 = vmatprep.subr.mxu0 0.0
    %273 = vmatpush1.xpose.msra.mxu0 0.0
    %274 = vmatprep.subr.mxu0 0.0
    %275 = vmatpush1.xpose.msra.mxu0 0.0
    %276 = vmatprep.subr.mxu0 0.0
    %277 = vmatpush1.xpose.msra.mxu0 0.0
    %278 = vmatprep.subr.mxu0 0.0
    %279 = vmatpush1.xpose.msra.mxu0 0.0
    %280 = vmatprep.subr.mxu0 0.0
    %281 = vmatpush1.xpose.msra.mxu0 0.0
    %282 = vmatprep.mubr.f32.mxu0 0.0
    %283 = vmatmul.mubr.f32.gmra.mrb[0].mxu0 %v128
    %v284 = vpop.f32.mrb[0].mxu0
    %v285 = vadd.f32 0.0, %v284
    %v286 = vpop.f32.mrb[0].mxu0
    %287 = vdwg.mxu0
    %v288 = vmul.f32 %v285, 0.25
    %v289 = vsel %vm217, %v288, -1e+30
    %vm290 = vcmask 64512
    %v291 = vsel %vm290, %v289, -inf
    %292 = vmax.xlane.f32.xlu0 %v291
    %v293 = vpop.xlane.xlu0 %292
    %v294 = vsub.f32 %v289, %v293
    %v295 = vmul.f32 %v294, 1.442695
    %v296 = vpow.pop %v295
    %v297 = vsel %vm290, %v296, 0.0
    %298 = vadd.xlane.f32.xlu0 %v297
    %v299 = vpop.xlane.xlu0 %298
    %v300 = vrcp.pop %v299
    %v301 = vmul.f32 %v296, %v300
    %v303 = vsel %vm290, %v301, 0
    %305 = vmatprep.subr.mxu0 0.0
    %306 = vmatpush1.msra.mxu0 %v205
    %307 = vmatprep.subr.mxu0 0.0
    %308 = vmatpush1.msra.mxu0 0.0
    %309 = vmatprep.subr.mxu0 0.0
    %310 = vmatpush1.msra.mxu0 0.0
    %311 = vmatprep.subr.mxu0 0.0
    %312 = vmatpush1.msra.mxu0 0.0
    %313 = vmatprep.subr.mxu0 0.0
    %314 = vmatpush1.msra.mxu0 0.0
    %315 = vmatprep.subr.mxu0 0.0
    %316 = vmatpush1.msra.mxu0 0.0
    %317 = vmatprep.subr.mxu0 0.0
    %318 = vmatpush1.msra.mxu0 0.0
    %319 = vmatprep.subr.mxu0 0.0
    %320 = vmatpush1.msra.mxu0 0.0
    %321 = vmatprep.subr.mxu0 0.0
    %322 = vmatpush1.msra.mxu0 0.0
    %323 = vmatprep.subr.mxu0 0.0
    %324 = vmatpush1.msra.mxu0 0.0
    %325 = vmatprep.subr.mxu0 0.0
    %326 = vmatpush1.msra.mxu0 0.0
    %327 = vmatprep.subr.mxu0 0.0
    %328 = vmatpush1.msra.mxu0 0.0
    %329 = vmatprep.subr.mxu0 0.0
    %330 = vmatpush1.msra.mxu0 0.0
    %331 = vmatprep.subr.mxu0 0.0
    %332 = vmatpush1.msra.mxu0 0.0
    %333 = vmatprep.subr.mxu0 0.0
    %334 = vmatpush1.msra.mxu0 0.0
    %335 = vmatprep.subr.mxu0 0.0
    %336 = vmatpush1.msra.mxu0 0.0
    %337 = vmatprep.subr.mxu0 0.0
    %338 = vmatpush1.msra.mxu0 0.0
    %339 = vmatprep.subr.mxu0 0.0
    %340 = vmatpush1.msra.mxu0 0.0
    %341 = vmatprep.subr.mxu0 0.0
    %342 = vmatpush1.msra.mxu0 0.0
    %343 = vmatprep.subr.mxu0 0.0
    %344 = vmatpush1.msra.mxu0 0.0
    %345 = vmatprep.subr.mxu0 0.0
    %346 = vmatpush1.msra.mxu0 0.0
    %347 = vmatprep.subr.mxu0 0.0
    %348 = vmatpush1.msra.mxu0 0.0
    %349 = vmatprep.subr.mxu0 0.0
    %350 = vmatpush1.msra.mxu0 0.0
    %351 = vmatprep.subr.mxu0 0.0
    %352 = vmatpush1.msra.mxu0 0.0
    %353 = vmatprep.subr.mxu0 0.0
    %354 = vmatpush1.msra.mxu0 0.0
    %355 = vmatprep.subr.mxu0 0.0
    %356 = vmatpush1.msra.mxu0 0.0
    %357 = vmatprep.subr.mxu0 0.0
    %358 = vmatpush1.msra.mxu0 0.0
    %359 = vmatprep.subr.mxu0 0.0
    %360 = vmatpush1.msra.mxu0 0.0
    %361 = vmatprep.subr.mxu0 0.0
    %362 = vmatpush1.msra.mxu0 0.0
    %363 = vmatprep.subr.mxu0 0.0
    %364 = vmatpush1.msra.mxu0 0.0
    %365 = vmatprep.subr.mxu0 0.0
    %366 = vmatpush1.msra.mxu0 0.0
    %367 = vmatprep.subr.mxu0 0.0
    %368 = vmatpush1.msra.mxu0 0.0
    %369 = vmatprep.mubr.f32.mxu0 0.0
    %370 = vmatmul.mubr.f32.gmra.mrb[0].mxu0 %v303
    %v371 = vpop.f32.mrb[0].mxu0
    %v372 = vadd.f32 0.0, %v371
    %v373 = vpop.f32.mrb[0].mxu0
    %374 = vdwg.mxu0
    %375 = vst [vmem:[#allocation7] sm:$0xff] %v372
    %376 = vmatprep.subr.mxu0 0.0
    %377 = vmatpush1.xpose.msra.mxu0 %v136
    %378 = vmatprep.subr.mxu0 0.0
    %379 = vmatpush1.xpose.msra.mxu0 0.0
    %380 = vmatprep.subr.mxu0 0.0
    %381 = vmatpush1.xpose.msra.mxu0 0.0
    %382 = vmatprep.subr.mxu0 0.0
    %383 = vmatpush1.xpose.msra.mxu0 0.0
    %384 = vmatprep.subr.mxu0 0.0
    %385 = vmatpush1.xpose.msra.mxu0 0.0
    %386 = vmatprep.subr.mxu0 0.0
    %387 = vmatpush1.xpose.msra.mxu0 0.0
    %388 = vmatprep.subr.mxu0 0.0
    %389 = vmatpush1.xpose.msra.mxu0 0.0
    %390 = vmatprep.subr.mxu0 0.0
    %391 = vmatpush1.xpose.msra.mxu0 0.0
    %392 = vmatprep.subr.mxu0 0.0
    %393 = vmatpush1.xpose.msra.mxu0 0.0
    %394 = vmatprep.subr.mxu0 0.0
    %395 = vmatpush1.xpose.msra.mxu0 0.0
    %396 = vmatprep.subr.mxu0 0.0
    %397 = vmatpush1.xpose.msra.mxu0 0.0
    %398 = vmatprep.subr.mxu0 0.0
    %399 = vmatpush1.xpose.msra.mxu0 0.0
    %400 = vmatprep.subr.mxu0 0.0
    %401 = vmatpush1.xpose.msra.mxu0 0.0
    %402 = vmatprep.subr.mxu0 0.0
    %403 = vmatpush1.xpose.msra.mxu0 0.0
    %404 = vmatprep.subr.mxu0 0.0
    %405 = vmatpush1.xpose.msra.mxu0 0.0
    %406 = vmatprep.subr.mxu0 0.0
    %407 = vmatpush1.xpose.msra.mxu0 0.0
    %408 = vmatprep.subr.mxu0 0.0
    %409 = vmatpush1.xpose.msra.mxu0 0.0
    %410 = vmatprep.subr.mxu0 0.0
    %411 = vmatpush1.xpose.msra.mxu0 0.0
    %412 = vmatprep.subr.mxu0 0.0
    %413 = vmatpush1.xpose.msra.mxu0 0.0
    %414 = vmatprep.subr.mxu0 0.0
    %415 = vmatpush1.xpose.msra.mxu0 0.0
    %416 = vmatprep.subr.mxu0 0.0
    %417 = vmatpush1.xpose.msra.mxu0 0.0
    %418 = vmatprep.subr.mxu0 0.0
    %419 = vmatpush1.xpose.msra.mxu0 0.0
    %420 = vmatprep.subr.mxu0 0.0
    %421 = vmatpush1.xpose.msra.mxu0 0.0
    %422 = vmatprep.subr.mxu0 0.0
    %423 = vmatpush1.xpose.msra.mxu0 0.0
    %424 = vmatprep.subr.mxu0 0.0
    %425 = vmatpush1.xpose.msra.mxu0 0.0
    %426 = vmatprep.subr.mxu0 0.0
    %427 = vmatpush1.xpose.msra.mxu0 0.0
    %428 = vmatprep.subr.mxu0 0.0
    %429 = vmatpush1.xpose.msra.mxu0 0.0
    %430 = vmatprep.subr.mxu0 0.0
    %431 = vmatpush1.xpose.msra.mxu0 0.0
    %432 = vmatprep.subr.mxu0 0.0
    %433 = vmatpush1.xpose.msra.mxu0 0.0
    %434 = vmatprep.subr.mxu0 0.0
    %435 = vmatpush1.xpose.msra.mxu0 0.0
    %436 = vmatprep.subr.mxu0 0.0
    %437 = vmatpush1.xpose.msra.mxu0 0.0
    %438 = vmatprep.subr.mxu0 0.0
    %439 = vmatpush1.xpose.msra.mxu0 0.0
    %440 = vmatprep.mubr.f32.mxu0 0.0
    %441 = vmatmul.mubr.f32.gmra.mrb[0].mxu0 %v134
    %v442 = vpop.f32.mrb[0].mxu0
    %v443 = vadd.f32 0.0, %v442
    %v444 = vpop.f32.mrb[0].mxu0
    %445 = vdwg.mxu0
    %v446 = vmul.f32 %v443, 0.25
    %v447 = vsel %vm217, %v446, -1e+30
    %v448 = vsel %vm290, %v447, -inf
    %449 = vmax.xlane.f32.xlu0 %v448
    %v450 = vpop.xlane.xlu0 %449
    %v451 = vsub.f32 %v447, %v450
    %v452 = vmul.f32 %v451, 1.442695
    %v453 = vpow.pop %v452
    %v454 = vsel %vm290, %v453, 0.0
    %455 = vadd.xlane.f32.xlu0 %v454
    %v456 = vpop.xlane.xlu0 %455
    %v457 = vrcp.pop %v456
    %v458 = vmul.f32 %v453, %v457
    %v460 = vsel %vm290, %v458, 0
    %462 = vmatprep.subr.mxu0 0.0
    %463 = vmatpush1.msra.mxu0 %v210
    %464 = vmatprep.subr.mxu0 0.0
    %465 = vmatpush1.msra.mxu0 0.0
    %466 = vmatprep.subr.mxu0 0.0
    %467 = vmatpush1.msra.mxu0 0.0
    %468 = vmatprep.subr.mxu0 0.0
    %469 = vmatpush1.msra.mxu0 0.0
    %470 = vmatprep.subr.mxu0 0.0
    %471 = vmatpush1.msra.mxu0 0.0
    %472 = vmatprep.subr.mxu0 0.0
    %473 = vmatpush1.msra.mxu0 0.0
    %474 = vmatprep.subr.mxu0 0.0
    %475 = vmatpush1.msra.mxu0 0.0
    %476 = vmatprep.subr.mxu0 0.0
    %477 = vmatpush1.msra.mxu0 0.0
    %478 = vmatprep.subr.mxu0 0.0
    %479 = vmatpush1.msra.mxu0 0.0
    %480 = vmatprep.subr.mxu0 0.0
    %481 = vmatpush1.msra.mxu0 0.0
    %482 = vmatprep.subr.mxu0 0.0
    %483 = vmatpush1.msra.mxu0 0.0
    %484 = vmatprep.subr.mxu0 0.0
    %485 = vmatpush1.msra.mxu0 0.0
    %486 = vmatprep.subr.mxu0 0.0
    %487 = vmatpush1.msra.mxu0 0.0
    %488 = vmatprep.subr.mxu0 0.0
    %489 = vmatpush1.msra.mxu0 0.0
    %490 = vmatprep.subr.mxu0 0.0
    %491 = vmatpush1.msra.mxu0 0.0
    %492 = vmatprep.subr.mxu0 0.0
    %493 = vmatpush1.msra.mxu0 0.0
    %494 = vmatprep.subr.mxu0 0.0
    %495 = vmatpush1.msra.mxu0 0.0
    %496 = vmatprep.subr.mxu0 0.0
    %497 = vmatpush1.msra.mxu0 0.0
    %498 = vmatprep.subr.mxu0 0.0
    %499 = vmatpush1.msra.mxu0 0.0
    %500 = vmatprep.subr.mxu0 0.0
    %501 = vmatpush1.msra.mxu0 0.0
    %502 = vmatprep.subr.mxu0 0.0
    %503 = vmatpush1.msra.mxu0 0.0
    %504 = vmatprep.subr.mxu0 0.0
    %505 = vmatpush1.msra.mxu0 0.0
    %506 = vmatprep.subr.mxu0 0.0
    %507 = vmatpush1.msra.mxu0 0.0
    %508 = vmatprep.subr.mxu0 0.0
    %509 = vmatpush1.msra.mxu0 0.0
    %510 = vmatprep.subr.mxu0 0.0
    %511 = vmatpush1.msra.mxu0 0.0
    %512 = vmatprep.subr.mxu0 0.0
    %513 = vmatpush1.msra.mxu0 0.0
    %514 = vmatprep.subr.mxu0 0.0
    %515 = vmatpush1.msra.mxu0 0.0
    %516 = vmatprep.subr.mxu0 0.0
    %517 = vmatpush1.msra.mxu0 0.0
    %518 = vmatprep.subr.mxu0 0.0
    %519 = vmatpush1.msra.mxu0 0.0
    %520 = vmatprep.subr.mxu0 0.0
    %521 = vmatpush1.msra.mxu0 0.0
    %522 = vmatprep.subr.mxu0 0.0
    %523 = vmatpush1.msra.mxu0 0.0
    %524 = vmatprep.subr.mxu0 0.0
    %525 = vmatpush1.msra.mxu0 0.0
    %526 = vmatprep.mubr.f32.mxu0 0.0
    %527 = vmatmul.mubr.f32.gmra.mrb[0].mxu0 %v460
    %v528 = vpop.f32.mrb[0].mxu0
    %v529 = vadd.f32 0.0, %v528
    %v530 = vpop.f32.mrb[0].mxu0
    %531 = vdwg.mxu0
    %532 = vst [vmem:[#allocation7 + $0x8] sm:$0xff] %v529
    // Predicated region
    $region18: #{tpu_custom_call.1} parent=1 // pred_check
      _
    $region19: #{tpu_custom_call.1} parent=1 // pred_check_branch
      %534 = sbr.rel (0) target = $region21
    $region20: #{tpu_custom_call.1} parent=1 // pred_region
      %s536 = ssub.s32 256, 256
      %537 = vsyncadd [#allocation4], %s536
      %s538 = sshll.u32 [#allocation7], 4
      %s539 = int_to_ptr.vmem [resolvable:$true] %s538
      %544 = dma.vmem_to_hbm [thread:$0]  %s539, 256, %s2, [#allocation4], 128, 128, 8
    $region21: #{tpu_custom_call.1} parent=1 // pred_fallthru
      _
    // Predicated region
    $region22: #{tpu_custom_call.1} parent=1 // pred_check
      _
    $region23: #{tpu_custom_call.1} parent=1 // pred_check_branch
      %546 = sbr.rel (0) target = $region25
    $region24: #{tpu_custom_call.1} parent=1 // pred_region
      %547 = dma.done [#allocation4], 256
    $region25: #{tpu_custom_call.1} parent=1 // pred_fallthru
      _
    %548 = vsyncpa [#allocation3], 1
    %549 = vsyncpa [#allocation6], 1
    %550 = vsyncpa [#allocation4], 1

</llo_original>
